<compile_context>
chip_gen: v6e
topology: v6e:2x2x1
jax: 0.10.0
libtpu: 0.0.40
codegen_flags: <defaults>
</compile_context>

<pallas_src>
import functools

import jax
import jax.numpy as jnp
from jax.experimental import pallas as pl
from jax.experimental.pallas import tpu as pltpu


def _round_up(x, m):
    return ((x + m - 1) // m) * m


def _device_vmem_mib():
    # v7x has 64 MiB VMEM per TensorCore; v4/v5e/v5p/v6e have 128 MiB.
    try:
        kind = jax.devices()[0].device_kind.lower()
    except Exception:
        return 64
    if "v7" in kind or "7x" in kind:
        return 64
    return 128


def _choose_block_rows(n, c, itemsize, target_block_bytes):
    rows = target_block_bytes // max(1, c * itemsize)
    rows = max(8, min(8192, (rows // 8) * 8))
    n_pad = _round_up(n, 8)
    rows = min(rows, n_pad)
    # Prefer >= 2 tiles so the "parallel" grid axis feeds both v7x TensorCores.
    if rows >= n_pad and n_pad >= 16:
        rows = max(8, _round_up((n_pad + 1) // 2, 8))
    return rows


def _ce_label_smooth_kernel(
    logits_ref,
    targets_ref,
    out_ref,
    *,
    epsilon,
    num_classes,
    n_rows,
    block_rows,
    mask_tail,
):
    # logits_ref: (TN, C) block in VMEM (native dtype, possibly bf16)
    # targets_ref: (TN, 1) int32 block in VMEM
    # out_ref: (1, 8, 128) f32 partial-sum block for this tile
    pid = pl.program_id(0)

    x = logits_ref[...]                                   # (TN, C)
    t = targets_ref[...]                                  # (TN, 1) int32
    tn, c = x.shape

    cc = jnp.float32(num_classes)
    one_m_eps = jnp.float32(1.0 - epsilon)
    eps_over_c = jnp.float32(epsilon) / cc

    xf = x.astype(jnp.float32)                            # no-op for f32 inputs

    # Per-row statistics from raw x (classes along lanes).
    row_max = jnp.max(xf, axis=1, keepdims=True)                       # (TN, 1)
    row_sum_x = jnp.sum(xf, axis=1, keepdims=True)                     # (TN, 1)

    # x[row, target[row]] via iota-compare + masked row-reduce (no scatter).
    col = jax.lax.broadcasted_iota(jnp.int32, (tn, c), 1)
    x_t_raw = jnp.sum(jnp.where(col == t, xf, 0.0), axis=1, keepdims=True)

    # Only full-width use of the max-subtraction: the (EUP) exp pass.
    sum_exp = jnp.sum(jnp.exp(xf - row_max), axis=1, keepdims=True)    # (TN, 1)
    lse = jnp.log(sum_exp)                                             # (TN, 1)

    # Shifted quantities recovered cheaply from (TN, 1) vectors.
    x_t = x_t_raw - row_max                               # shifted[row, t]
    row_sum = row_sum_x - cc * row_max                    # sum_c shifted[row, c]

    # loss_row = lse - (1-eps)*x_t - (eps/C)*row_sum
    per_row = lse - one_m_eps * x_t - eps_over_c * row_sum             # (TN, 1)

    if mask_tail:
        # Mask rows past the true batch size (padded last tile, unspecified data).
        row_ids = pid * block_rows + jax.lax.broadcasted_iota(jnp.int32, (tn, 1), 0)
        per_row = jnp.where(row_ids < n_rows, per_row, 0.0)

    out_ref[...] = jnp.full(out_ref.shape, jnp.sum(per_row), dtype=jnp.float32)


def cross_entropy_label_smooth(inputs, targets, *, num_classes, epsilon, block_rows=None):
    """inputs: (N, num_classes) float logits; targets: (N,) int class ids."""
    n, c = inputs.shape
    assert c == num_classes
    targets_2d = targets.astype(jnp.int32).reshape(n, 1)

    itemsize = jnp.dtype(inputs.dtype).itemsize
    if _device_vmem_mib() <= 64:
        # v7x: 64 MiB physical VMEM -> smaller blocks, modest scoped limit.
        target_block_bytes = 3 * 1024 * 1024
        vmem_limit_bytes = 40 * 1024 * 1024
    else:
        # v5e / v6e: 128 MiB physical VMEM -> bigger blocks amortize step overhead.
        target_block_bytes = 8 * 1024 * 1024
        vmem_limit_bytes = 64 * 1024 * 1024

    if block_rows is None:
        block_rows = _choose_block_rows(n, c, itemsize, target_block_bytes)
    block_rows = max(8, (int(block_rows) // 8) * 8)
    num_tiles = -(-n // block_rows)
    mask_tail = (n % block_rows) != 0

    kernel = functools.partial(
        _ce_label_smooth_kernel,
        epsilon=float(epsilon),
        num_classes=int(num_classes),
        n_rows=int(n),
        block_rows=int(block_rows),
        mask_tail=bool(mask_tail),
    )

    partials = pl.pallas_call(
        kernel,
        out_shape=jax.ShapeDtypeStruct((num_tiles, 8, 128), jnp.float32),
        grid=(num_tiles,),
        in_specs=[
            pl.BlockSpec((block_rows, c), lambda i: (i, 0)),
            pl.BlockSpec((block_rows, 1), lambda i: (i, 0)),
        ],
        out_specs=pl.BlockSpec((1, 8, 128), lambda i: (i, 0, 0)),
        compiler_params=pltpu.CompilerParams(
            dimension_semantics=("parallel",),
            vmem_limit_bytes=vmem_limit_bytes,
        ),
    )(inputs, targets_2d)

    # Per-tile partial sums -> scalar loss; /N applied exactly once, here.
    return jnp.sum(partials[:, 0, 0]) / jnp.float32(n)


if __name__ == "__main__":
    key = jax.random.PRNGKey(0)

    def ref_loss(logits, targets, num_classes, epsilon):
        lp = jax.nn.log_softmax(logits.astype(jnp.float32), axis=1)
        oh = jax.nn.one_hot(targets, num_classes, dtype=jnp.float32)
        sm = (1.0 - epsilon) * oh + epsilon / num_classes
        return jnp.sum(jnp.mean(-sm * lp, axis=0))

    epsilon = 0.1

    # Case 1: tiny classification-sized problem (single 8-row tile).
    num_classes1, batch1 = 16, 8
    k1, k2, k3, k4 = jax.random.split(key, 4)
    logits1 = jax.random.normal(k1, (batch1, num_classes1), dtype=jnp.float32)
    targets1 = jax.random.randint(k2, (batch1,), 0, num_classes1, dtype=jnp.int32)
    loss1 = cross_entropy_label_smooth(
        logits1, targets1, num_classes=num_classes1, epsilon=epsilon
    )
    jax.block_until_ready(loss1)
    ref1 = ref_loss(logits1, targets1, num_classes1, epsilon)
    assert jnp.allclose(loss1, ref1, rtol=1e-4, atol=1e-4), (loss1, ref1)

    # Case 2: explicit block_rows -> multiple tiles + masked padded last tile.
    num_classes2, batch2 = 256, 300
    logits2 = jax.random.normal(k3, (batch2, num_classes2), dtype=jnp.float32)
    targets2 = jax.random.randint(k4, (batch2,), 0, num_classes2, dtype=jnp.int32)
    loss2 = cross_entropy_label_smooth(
        logits2, targets2, num_classes=num_classes2, epsilon=epsilon, block_rows=128
    )
    jax.block_until_ready(loss2)
    ref2 = ref_loss(logits2, targets2, num_classes2, epsilon)
    assert jnp.allclose(loss2, ref2, rtol=1e-4, atol=1e-4), (loss2, ref2)

    # Case 3: auto block sizing (exercises the >=2-tile split + tail mask path).
    loss3 = cross_entropy_label_smooth(
        logits2, targets2, num_classes=num_classes2, epsilon=epsilon
    )
    jax.block_until_ready(loss3)
    assert jnp.allclose(loss3, ref2, rtol=1e-4, atol=1e-4), (loss3, ref2)

    # Case 4: bf16 logits accepted end-to-end (halved HBM traffic path).
    logits_bf16 = logits2.astype(jnp.bfloat16)
    loss4 = cross_entropy_label_smooth(
        logits_bf16, targets2, num_classes=num_classes2, epsilon=epsilon
    )
    jax.block_until_ready(loss4)
    ref4 = ref_loss(logits_bf16, targets2, num_classes2, epsilon)
    assert jnp.allclose(loss4, ref4, rtol=2e-2, atol=2e-2), (loss4, ref4)

    print("KERNEL_OK")
</pallas_src>

<mosaic_0001>
module attributes {stable_mosaic.version = 11 : i64} {
  func.func @_ce_label_smooth_kernel(%arg0: i32, %arg1: memref<8x16xf32, #tpu.memory_space<vmem>>, %arg2: memref<8x1xi32, #tpu.memory_space<vmem>>, %arg3: memref<1x8x128xf32, #tpu.memory_space<vmem>>) attributes {dimension_semantics = [#tpu.dimension_semantics<parallel>], iteration_bounds = array<i64: 1>, scalar_prefetch = 0 : i64, scratch_operands = 0 : i64, tpu.core_type = #tpu.core_type<tc>, window_params = [{transform_indices = @transform_0, window_bounds = array<i64: 8, 16>}, {transform_indices = @transform_1, window_bounds = array<i64: 8, 1>}, {transform_indices = @transform_2, window_bounds = array<i64: 1, 8, 128>}]} {
    %c0 = arith.constant 0 : index
    %c0_0 = arith.constant 0 : index
    %0 = vector.load %arg1[%c0, %c0_0] : memref<8x16xf32, #tpu.memory_space<vmem>>, vector<8x16xf32>
    %c0_1 = arith.constant 0 : index
    %c0_2 = arith.constant 0 : index
    %1 = vector.load %arg2[%c0_1, %c0_2] : memref<8x1xi32, #tpu.memory_space<vmem>>, vector<8x1xi32>
    %cst = arith.constant 1.000000e-01 : f32
    %cst_3 = arith.constant 1.600000e+01 : f32
    %2 = arith.divf %cst, %cst_3 : f32
    %cst_4 = arith.constant dense<0xFF800000> : vector<8xf32>
    %3 = vector.multi_reduction <maximumf>, %0, %cst_4 [1] : vector<8x16xf32> to vector<8xf32>
    %4 = vector.shape_cast %3 : vector<8xf32> to vector<8x1xf32>
    %cst_5 = arith.constant dense<0.000000e+00> : vector<8xf32>
    %5 = vector.multi_reduction <add>, %0, %cst_5 [1] : vector<8x16xf32> to vector<8xf32>
    %6 = vector.shape_cast %5 : vector<8xf32> to vector<8x1xf32>
    %7 = tpu.iota {dimensions = array<i32: 1>} : vector<8x16xi32>
    %8 = vector.broadcast %1 : vector<8x1xi32> to vector<8x16xi32>
    %9 = arith.cmpi eq, %7, %8 : vector<8x16xi32>
    %cst_6 = arith.constant 0.000000e+00 : f32
    %10 = vector.broadcast %cst_6 : f32 to vector<8x16xf32>
    %11 = arith.select %9, %0, %10 : vector<8x16xi1>, vector<8x16xf32>
    %cst_7 = arith.constant dense<0.000000e+00> : vector<8xf32>
    %12 = vector.multi_reduction <add>, %11, %cst_7 [1] : vector<8x16xf32> to vector<8xf32>
    %13 = vector.shape_cast %12 : vector<8xf32> to vector<8x1xf32>
    %14 = vector.broadcast %4 : vector<8x1xf32> to vector<8x16xf32>
    %15 = arith.subf %0, %14 : vector<8x16xf32>
    %16 = math.exp %15 : vector<8x16xf32>
    %cst_8 = arith.constant dense<0.000000e+00> : vector<8xf32>
    %17 = vector.multi_reduction <add>, %16, %cst_8 [1] : vector<8x16xf32> to vector<8xf32>
    %18 = vector.shape_cast %17 : vector<8xf32> to vector<8x1xf32>
    %19 = math.log %18 : vector<8x1xf32>
    %20 = arith.subf %13, %4 : vector<8x1xf32>
    %cst_9 = arith.constant 1.600000e+01 : f32
    %21 = vector.broadcast %cst_9 : f32 to vector<8x1xf32>
    %22 = arith.mulf %21, %4 : vector<8x1xf32>
    %23 = arith.subf %6, %22 : vector<8x1xf32>
    %cst_10 = arith.constant 0.899999976 : f32
    %24 = vector.broadcast %cst_10 : f32 to vector<8x1xf32>
    %25 = arith.mulf %24, %20 : vector<8x1xf32>
    %26 = arith.subf %19, %25 : vector<8x1xf32>
    %27 = vector.broadcast %2 : f32 to vector<8x1xf32>
    %28 = arith.mulf %27, %23 : vector<8x1xf32>
    %29 = arith.subf %26, %28 : vector<8x1xf32>
    %30 = vector.shape_cast %29 : vector<8x1xf32> to vector<1x8x1xf32>
    %cst_11 = arith.constant dense<0.000000e+00> : vector<1xf32>
    %31 = vector.multi_reduction <add>, %30, %cst_11 [1, 2] : vector<1x8x1xf32> to vector<1xf32>
    %32 = vector.shape_cast %31 : vector<1xf32> to vector<1x1x1xf32>
    %33 = vector.extract %32[0, 0, 0] : f32 from vector<1x1x1xf32>
    %34 = vector.broadcast %33 : f32 to vector<1x8x128xf32>
    %c0_12 = arith.constant 0 : index
    %c0_13 = arith.constant 0 : index
    %c0_14 = arith.constant 0 : index
    %35 = vector.load %arg3[%c0_12, %c0_13, %c0_14] : memref<1x8x128xf32, #tpu.memory_space<vmem>>, vector<1x8x128xf32>
    tpu.vector_store %arg3[%c0_12, %c0_13, %c0_14], %34 {strides = array<i32>} : memref<1x8x128xf32, #tpu.memory_space<vmem>>, vector<1x8x128xf32>,
    return
  }
  func.func @transform_0(%arg0: i32) -> (i32, i32) {
    %c0_i32 = arith.constant 0 : i32
    %c0_i32_0 = arith.constant 0 : i32
    return %arg0, %c0_i32 : i32, i32
  }
  func.func @transform_1(%arg0: i32) -> (i32, i32) {
    %c0_i32 = arith.constant 0 : i32
    %c0_i32_0 = arith.constant 0 : i32
    return %arg0, %c0_i32 : i32, i32
  }
  func.func @transform_2(%arg0: i32) -> (i32, i32, i32) {
    %c0_i32 = arith.constant 0 : i32
    %c0_i32_0 = arith.constant 0 : i32
    %c0_i32_1 = arith.constant 0 : i32
    return %arg0, %c0_i32, %c0_i32_0 : i32, i32, i32
  }
}

</mosaic_0001>

<llo_original>
// kernel: tpu_custom_call.1
$region0: #{tpu_custom_call.1}
  #allocation0 [shape = 'u32[]', space=smem, size = 0x4, offset = 0x4, fixed_abs, tag = 'smem constant byte address 0x4 - core index']
  #allocation1 [shape = 'u32[144,128]{1,0:T(1,128)}', space=vmem, size = 0x12000, scoped, tag = 'internal scratch']
  %s0 = inlined_call_operand.vmem [shape: f32[8,16], index: 0, kind: input, shape index: {}]
  %s1 = inlined_call_operand.vmem [shape: s32[8,1], index: 1, kind: input, shape index: {}]
  %s2 = inlined_call_operand.hbm [shape: f32[1,8,128], index: 2, kind: output, shape index: {}]
  %s3 = sld [smem:[#allocation0]]
  $region18: #{tpu_custom_call.1} parent=0
    _
  %s5 = ssub.s32 1, %s3
  %s6 = scalar_select 0, %s5, %s3
  $region1: #{tpu_custom_call.1} parent=0
    #allocation2 [shape = 'u8[4096]{0}', space=vmem, size = 0x1000, scoped, tag = 'output window, operand 0, single buffered']
    #allocation3 [shape = 's32[1]{0}', space=sflag, size = 0x4, scoped, tag = 'scoped memory for tpu_custom_call.1']
    %7 = vsyncpa [#allocation3], 0
    // Predicated region
    $region2: #{tpu_custom_call.1} parent=1 // pred_check
      _
    $region3: #{tpu_custom_call.1} parent=1 // pred_check_branch
      %9 = sbr.rel (0) target = $region5
    $region4: #{tpu_custom_call.1} parent=1 // pred_region
      _
    $region5: #{tpu_custom_call.1} parent=1 // pred_fallthru
      _
    // Predicated region
    $region6: #{tpu_custom_call.1} parent=1 // pred_check
      _
    $region7: #{tpu_custom_call.1} parent=1 // pred_check_branch
      %11 = sbr.rel (0) target = $region9
    $region8: #{tpu_custom_call.1} parent=1 // pred_region
      _
    $region9: #{tpu_custom_call.1} parent=1 // pred_fallthru
      _
    %v12 = vld [vmem:[%s0] sm:$0xff]
    %v13 = vld [vmem:[%s1] sm:$0xff]
    %vm14 = vcmask 130048
    %v15 = vsel %vm14, %v12, -inf
    %16 = vmax.xlane.f32.xlu0 %v15
    %v17 = vpop.xlane.xlu0 %16
    %v18 = vsel %vm14, %v12, 0.0
    %19 = vadd.xlane.f32.xlu0 %v18
    %v20 = vpop.xlane.xlu0 %19
    %v21 = vlaneseq
    %v22 = vand.u32 %v21, 127
    %23 = vset.pattern.permute.xlu0 0
    %24 = vperm.xlu0 %23, %v13
    %v25 = vpop.permute.xlu0 %24
    %vm26 = vcmp.eq.s32.totalorder %v22, %v25
    %v27 = vsel %vm26, %v12, 0.0
    %v28 = vsel %vm14, %v27, 0.0
    %29 = vadd.xlane.f32.xlu0 %v28
    %v30 = vpop.xlane.xlu0 %29
    %v31 = vsub.f32 %v12, %v17
    %v32 = vmul.f32 %v31, 1.442695
    %v33 = vpow.pop %v32
    %v34 = vsel %vm14, %v33, 0.0
    %35 = vadd.xlane.f32.xlu0 %v34
    %v36 = vpop.xlane.xlu0 %35
    %v37 = vlog2.pop %v36
    %v38 = vmul.f32 %v37, 0.6931472
    %v39 = vsub.f32 %v30, %v17
    %v40 = vmul.f32 %v17, 16.0
    %v41 = vsub.f32 %v20, %v40
    %v42 = vmul.f32 %v39, 0.9
    %v43 = vsub.f32 %v38, %v42
    %v44 = vmul.f32 %v41, 0.00625
    %v45 = vsub.f32 %v43, %v44
    %vm46 = vcmask 7168
    %v47 = vsel %vm46, %v45, 0.0
    %48 = vadd.xlane.f32.xlu0 %v47
    %v49 = vpop.xlane.xlu0 %48
    %v50 = vrot.slane %v49, 4
    %v51 = vadd.f32 %v49, %v50
    %v52 = vrot.slane %v51, 2
    %v53 = vadd.f32 %v51, %v52
    %v54 = vrot.slane %v53, 1
    %v55 = vadd.f32 %v53, %v54
    %s56 = vtos %v55
    %v57 = vstv %s56
    %58 = vst [vmem:[#allocation2] sm:$0xff] %v57
    // Predicated region
    $region10: #{tpu_custom_call.1} parent=1 // pred_check
      _
    $region11: #{tpu_custom_call.1} parent=1 // pred_check_branch
      %60 = sbr.rel (0) target = $region13
    $region12: #{tpu_custom_call.1} parent=1 // pred_region
      %s62 = ssub.s32 128, 128
      %63 = vsyncadd [#allocation3], %s62
      %s65 = sshll.u32 [#allocation2], 4
      %s66 = int_to_ptr.vmem [resolvable:$true] %s65
      %68 = dma.vmem_to_hbm [thread:$0]  %s66, 128, %s2, [#allocation3]
    $region13: #{tpu_custom_call.1} parent=1 // pred_fallthru
      _
    // Predicated region
    $region14: #{tpu_custom_call.1} parent=1 // pred_check
      _
    $region15: #{tpu_custom_call.1} parent=1 // pred_check_branch
      %70 = sbr.rel (0) target = $region17
    $region16: #{tpu_custom_call.1} parent=1 // pred_region
      %71 = dma.done [#allocation3], 128
    $region17: #{tpu_custom_call.1} parent=1 // pred_fallthru
      _
    %72 = vsyncpa [#allocation3], 1

</llo_original>
